<compile_context>
chip_gen: v7x
topology: tpu7x:2x2x1
jax: 0.10.0
libtpu: 0.0.40
codegen_flags: <defaults>
</compile_context>

<pallas_src>
import jax
import jax.numpy as jnp
from jax.experimental import pallas as pl
from jax.experimental.pallas import tpu as pltpu

LANE = 128


def _round_up(x, m):
    return ((x + m - 1) // m) * m


def _cdiv(a, b):
    return (a + b - 1) // b


def _forward_mlp_kernel(x_ref, a_ref, w1s_ref, w1a_ref, w23_ref, b_ref, o_ref):
    # x_ref   : [TB, SDp]  bf16 padded states
    # a_ref   : [TB, 1]    int32 action ids (Discrete)
    # w1s_ref : [SDp, S]   bf16 state rows of W1   [in_features, out_features]
    # w1a_ref : [Ap,  S]   bf16 action rows of W1 (zero-padded to Ap rows)
    # w23_ref : [2, S, S]  bf16 (W2, W3)
    # b_ref   : [8, S]     f32 rows 0..2 = b1, b2, b3 (rest zero)
    # o_ref   : [TB, S]    padded output (valid cols [:state_dim])
    tb = x_ref.shape[0]
    ap = w1a_ref.shape[0]

    # One-hot built in-kernel; padded lanes >= n_actions never match any action id.
    onehot = (jax.lax.broadcasted_iota(jnp.int32, (tb, ap), 1)
              == a_ref[...]).astype(jnp.bfloat16)

    # Layer 1: split contraction (state rows + action rows of W1), f32 accumulate.
    h1 = (jnp.dot(x_ref[...], w1s_ref[...], preferred_element_type=jnp.float32)
          + jnp.dot(onehot, w1a_ref[...], preferred_element_type=jnp.float32)
          + b_ref[0:1, :])
    h1 = jnp.maximum(h1, 0.0)                                        # ReLU (f32)

    h2 = jnp.dot(h1.astype(jnp.bfloat16), w23_ref[0],
                 preferred_element_type=jnp.float32) + b_ref[1:2, :]
    h2 = jnp.maximum(h2, 0.0)                                        # ReLU (f32)

    o_ref[...] = (jnp.dot(h2.astype(jnp.bfloat16), w23_ref[1],
                          preferred_element_type=jnp.float32)
                  + b_ref[2:3, :]).astype(o_ref.dtype)


def forward_model_pallas(states, actions, packed_params, *,
                         block_batch=1024, out_dtype=jnp.float32):
    """states: [B, state_dim] float, actions: [B] int32 (Discrete action ids)."""
    # TODO(synk): Box (continuous) action spaces are not handled; they would feed
    # `actions` as extra bf16 feature columns instead of the in-kernel one-hot.
    w1s, w1a, w23, b_slab = packed_params
    B, state_dim = states.shape
    SDp, S = w1s.shape
    Ap = w1a.shape[0]

    # bf16 activations (matmul operands are bf16 anyway): halves the input DMA.
    x = states.astype(jnp.bfloat16)
    if SDp != state_dim:
        x = jnp.pad(x, ((0, 0), (0, SDp - state_dim)))
    a = actions.reshape(B, 1).astype(jnp.int32)

    # Batch tiling: TB is a multiple of 16.  Small B -> single grid step; large B
    # -> balanced steps (parallel axis shards across the two v7x TensorCores).
    B16 = _round_up(B, 16)
    n_steps = max(1, _cdiv(B16, block_batch))
    TB = _round_up(_cdiv(B16, n_steps), 16)
    B_pad = n_steps * TB
    if B_pad != B:
        x = jnp.pad(x, ((0, B_pad - B), (0, 0)))
        a = jnp.pad(a, ((0, B_pad - B), (0, 0)))   # padded rows use action 0; discarded

    flops = 2 * B_pad * S * (SDp + Ap + 2 * S)
    bytes_accessed = (x.size * 2 + a.size * 4
                      + w1s.size * 2 + w1a.size * 2 + w23.size * 2
                      + b_slab.size * 4
                      + B_pad * S * jnp.dtype(out_dtype).itemsize)

    out = pl.pallas_call(
        _forward_mlp_kernel,
        out_shape=jax.ShapeDtypeStruct((B_pad, S), out_dtype),
        grid=(n_steps,),
        in_specs=[
            pl.BlockSpec((TB, SDp), lambda i: (i, 0)),     # states: batch-tiled
            pl.BlockSpec((TB, 1), lambda i: (i, 0)),       # actions: batch-tiled
            pl.BlockSpec((SDp, S), lambda i: (0, 0)),      # W1 state rows: resident
            pl.BlockSpec((Ap, S), lambda i: (0, 0)),       # W1 action rows: resident
            pl.BlockSpec((2, S, S), lambda i: (0, 0, 0)),  # W2, W3: resident
            pl.BlockSpec((8, S), lambda i: (0, 0)),        # biases: resident
        ],
        out_specs=pl.BlockSpec((TB, S), lambda i: (i, 0)),
        compiler_params=pltpu.CompilerParams(
            dimension_semantics=("parallel",)),            # megacore-shard on v7x
        cost_estimate=pl.CostEstimate(
            flops=flops, transcendentals=0, bytes_accessed=bytes_accessed),
    )(x, a, w1s, w1a, w23, b_slab)

    return out[:B, :state_dim]


def init_params(key, state_dim, n_actions, hidden_size):
    """Torch-like U(-1/sqrt(fan_in), 1/sqrt(fan_in)) init.
    Returns (packed kernel params, raw f32 params for reference)."""
    def linear(k, fan_in, fan_out):
        kw, kb = jax.random.split(k)
        bound = 1.0 / jnp.sqrt(jnp.float32(fan_in))
        w = jax.random.uniform(kw, (fan_in, fan_out), jnp.float32, -bound, bound)
        b = jax.random.uniform(kb, (fan_out,), jnp.float32, -bound, bound)
        return w, b

    k_in = state_dim + n_actions
    k1, k2, k3 = jax.random.split(key, 3)
    w1, b1 = linear(k1, k_in, hidden_size)
    w2, b2 = linear(k2, hidden_size, hidden_size)
    w3, b3 = linear(k3, hidden_size, state_dim)

    S = max(_round_up(hidden_size, LANE), _round_up(state_dim, LANE))
    SDp = _round_up(state_dim, 8)
    Ap = _round_up(max(n_actions, 8), 8)

    def pad_to(w, rows, cols):
        return jnp.pad(w, ((0, rows - w.shape[0]), (0, cols - w.shape[1])))

    w1s = pad_to(w1[:state_dim, :], SDp, S).astype(jnp.bfloat16)
    w1a = pad_to(w1[state_dim:, :], Ap, S).astype(jnp.bfloat16)
    w23 = jnp.stack([pad_to(w2, S, S), pad_to(w3, S, S)]).astype(jnp.bfloat16)
    b_rows = jnp.stack([jnp.pad(b1, (0, S - b1.shape[0])),
                        jnp.pad(b2, (0, S - b2.shape[0])),
                        jnp.pad(b3, (0, S - b3.shape[0]))])
    b_slab = jnp.pad(b_rows, ((0, 8 - 3), (0, 0))).astype(jnp.float32)

    return (w1s, w1a, w23, b_slab), (w1, b1, w2, b2, w3, b3)


if __name__ == "__main__":
    B, state_dim, n_actions, hidden_size = 50, 16, 4, 64

    key = jax.random.PRNGKey(0)
    k_params, k_states, k_actions = jax.random.split(key, 3)

    packed, raw = init_params(k_params, state_dim, n_actions, hidden_size)

    states = jax.random.normal(k_states, (B, state_dim), jnp.float32)
    actions = jax.random.randint(k_actions, (B,), 0, n_actions, dtype=jnp.int32)

    # Default block_batch: B=50 becomes a single 64-row grid step (TB multiple of 16).
    out = forward_model_pallas(states, actions, packed)
    jax.block_until_ready(out)
    assert out.shape == (B, state_dim)

    w1, b1, w2, b2, w3, b3 = raw
    x = jnp.concatenate(
        [states, jax.nn.one_hot(actions, n_actions, dtype=jnp.float32)], axis=1)

    # (a) bf16-matmul reference: same math as the kernel (splitting W1 into state /
    #     action rows only changes f32 accumulation order).
    bf = jnp.bfloat16
    h1 = jnp.maximum(jnp.dot(x.astype(bf), w1.astype(bf),
                             preferred_element_type=jnp.float32) + b1[None, :], 0.0)
    h2 = jnp.maximum(jnp.dot(h1.astype(bf), w2.astype(bf),
                             preferred_element_type=jnp.float32) + b2[None, :], 0.0)
    ref_bf16 = jnp.dot(h2.astype(bf), w3.astype(bf),
                       preferred_element_type=jnp.float32) + b3[None, :]
    assert jnp.allclose(out, ref_bf16, atol=1e-4, rtol=1e-4), \
        float(jnp.max(jnp.abs(out - ref_bf16)))

    # (b) full-f32 reference matching the original torch module semantics
    #     (loose tolerance only accounts for bf16 matmul operands).
    h1f = jnp.maximum(x @ w1 + b1[None, :], 0.0)
    h2f = jnp.maximum(h1f @ w2 + b2[None, :], 0.0)
    ref_f32 = h2f @ w3 + b3[None, :]
    assert jnp.allclose(out, ref_f32, atol=5e-2, rtol=5e-2), \
        float(jnp.max(jnp.abs(out - ref_f32)))

    print("KERNEL_OK")
</pallas_src>

<mosaic_0001>
module attributes {stable_mosaic.version = 11 : i64} {
  func.func @_forward_mlp_kernel(%arg0: i32, %arg1: memref<64x16xbf16, #tpu.memory_space<vmem>>, %arg2: memref<64x1xi32, #tpu.memory_space<vmem>>, %arg3: memref<16x128xbf16, #tpu.memory_space<vmem>>, %arg4: memref<8x128xbf16, #tpu.memory_space<vmem>>, %arg5: memref<2x128x128xbf16, #tpu.memory_space<vmem>>, %arg6: memref<8x128xf32, #tpu.memory_space<vmem>>, %arg7: memref<64x128xf32, #tpu.memory_space<vmem>>) attributes {dimension_semantics = [#tpu.dimension_semantics<parallel>], iteration_bounds = array<i64: 1>, scalar_prefetch = 0 : i64, scratch_operands = 0 : i64, tpu.core_type = #tpu.core_type<tc>, window_params = [{transform_indices = @transform_0, window_bounds = array<i64: 64, 16>}, {transform_indices = @transform_1, window_bounds = array<i64: 64, 1>}, {pipeline_mode = #tpu.pipeline_mode<synchronous>, transform_indices = @transform_2, window_bounds = array<i64: 16, 128>}, {pipeline_mode = #tpu.pipeline_mode<synchronous>, transform_indices = @transform_3, window_bounds = array<i64: 8, 128>}, {pipeline_mode = #tpu.pipeline_mode<synchronous>, transform_indices = @transform_4, window_bounds = array<i64: 2, 128, 128>}, {pipeline_mode = #tpu.pipeline_mode<synchronous>, transform_indices = @transform_5, window_bounds = array<i64: 8, 128>}, {transform_indices = @transform_6, window_bounds = array<i64: 64, 128>}]} {
    %0 = tpu.iota {dimensions = array<i32: 1>} : vector<64x8xi32>
    %c0 = arith.constant 0 : index
    %c0_0 = arith.constant 0 : index
    %1 = vector.load %arg2[%c0, %c0_0] : memref<64x1xi32, #tpu.memory_space<vmem>>, vector<64x1xi32>
    %2 = vector.broadcast %1 : vector<64x1xi32> to vector<64x8xi32>
    %3 = arith.cmpi eq, %0, %2 : vector<64x8xi32>
    %4 = arith.extui %3 : vector<64x8xi1> to vector<64x8xi32>
    %5 = arith.sitofp %4 : vector<64x8xi32> to vector<64x8xf32>
    %6 = arith.truncf %5 : vector<64x8xf32> to vector<64x8xbf16>
    %c0_1 = arith.constant 0 : index
    %c0_2 = arith.constant 0 : index
    %7 = vector.load %arg1[%c0_1, %c0_2] : memref<64x16xbf16, #tpu.memory_space<vmem>>, vector<64x16xbf16>
    %c0_3 = arith.constant 0 : index
    %c0_4 = arith.constant 0 : index
    %8 = vector.load %arg3[%c0_3, %c0_4] : memref<16x128xbf16, #tpu.memory_space<vmem>>, vector<16x128xbf16>
    %cst = arith.constant dense<0.000000e+00> : vector<64x128xf32>
    %9 = tpu.matmul %7, %8, %cst {dimension_numbers = #tpu.dot_dimension_numbers<[1], [0], [0], [1], [0, 0, 1, 1], [], []>} : vector<64x16xbf16>, vector<16x128xbf16>, vector<64x128xf32> -> vector<64x128xf32>
    %c0_5 = arith.constant 0 : index
    %c0_6 = arith.constant 0 : index
    %10 = vector.load %arg4[%c0_5, %c0_6] : memref<8x128xbf16, #tpu.memory_space<vmem>>, vector<8x128xbf16>
    %cst_7 = arith.constant dense<0.000000e+00> : vector<64x128xf32>
    %11 = tpu.matmul %6, %10, %cst_7 {dimension_numbers = #tpu.dot_dimension_numbers<[1], [0], [0], [1], [0, 0, 1, 1], [], []>} : vector<64x8xbf16>, vector<8x128xbf16>, vector<64x128xf32> -> vector<64x128xf32>
    %12 = arith.addf %9, %11 : vector<64x128xf32>
    %c0_8 = arith.constant 0 : index
    %c0_9 = arith.constant 0 : index
    %13 = vector.load %arg6[%c0_8, %c0_9] : memref<8x128xf32, #tpu.memory_space<vmem>>, vector<1x128xf32>
    %14 = vector.broadcast %13 : vector<1x128xf32> to vector<64x128xf32>
    %15 = arith.addf %12, %14 : vector<64x128xf32>
    %cst_10 = arith.constant 0.000000e+00 : f32
    %16 = vector.broadcast %cst_10 : f32 to vector<64x128xf32>
    %17 = arith.maximumf %15, %16 : vector<64x128xf32>
    %18 = arith.truncf %17 : vector<64x128xf32> to vector<64x128xbf16>
    %c0_11 = arith.constant 0 : index
    %c0_12 = arith.constant 0 : index
    %c0_13 = arith.constant 0 : index
    %19 = vector.load %arg5[%c0_11, %c0_12, %c0_13] : memref<2x128x128xbf16, #tpu.memory_space<vmem>>, vector<1x128x128xbf16>
    %20 = vector.shape_cast %19 : vector<1x128x128xbf16> to vector<128x128xbf16>
    %cst_14 = arith.constant dense<0.000000e+00> : vector<64x128xf32>
    %21 = tpu.matmul %18, %20, %cst_14 {dimension_numbers = #tpu.dot_dimension_numbers<[1], [0], [0], [1], [0, 0, 1, 1], [], []>} : vector<64x128xbf16>, vector<128x128xbf16>, vector<64x128xf32> -> vector<64x128xf32>
    %c1 = arith.constant 1 : index
    %c0_15 = arith.constant 0 : index
    %22 = vector.load %arg6[%c1, %c0_15] : memref<8x128xf32, #tpu.memory_space<vmem>>, vector<1x128xf32>
    %23 = vector.broadcast %22 : vector<1x128xf32> to vector<64x128xf32>
    %24 = arith.addf %21, %23 : vector<64x128xf32>
    %cst_16 = arith.constant 0.000000e+00 : f32
    %25 = vector.broadcast %cst_16 : f32 to vector<64x128xf32>
    %26 = arith.maximumf %24, %25 : vector<64x128xf32>
    %27 = arith.truncf %26 : vector<64x128xf32> to vector<64x128xbf16>
    %c1_17 = arith.constant 1 : index
    %c0_18 = arith.constant 0 : index
    %c0_19 = arith.constant 0 : index
    %28 = vector.load %arg5[%c1_17, %c0_18, %c0_19] : memref<2x128x128xbf16, #tpu.memory_space<vmem>>, vector<1x128x128xbf16>
    %29 = vector.shape_cast %28 : vector<1x128x128xbf16> to vector<128x128xbf16>
    %cst_20 = arith.constant dense<0.000000e+00> : vector<64x128xf32>
    %30 = tpu.matmul %27, %29, %cst_20 {dimension_numbers = #tpu.dot_dimension_numbers<[1], [0], [0], [1], [0, 0, 1, 1], [], []>} : vector<64x128xbf16>, vector<128x128xbf16>, vector<64x128xf32> -> vector<64x128xf32>
    %c2 = arith.constant 2 : index
    %c0_21 = arith.constant 0 : index
    %31 = vector.load %arg6[%c2, %c0_21] : memref<8x128xf32, #tpu.memory_space<vmem>>, vector<1x128xf32>
    %32 = vector.broadcast %31 : vector<1x128xf32> to vector<64x128xf32>
    %33 = arith.addf %30, %32 : vector<64x128xf32>
    %c0_22 = arith.constant 0 : index
    %c0_23 = arith.constant 0 : index
    %34 = vector.load %arg7[%c0_22, %c0_23] : memref<64x128xf32, #tpu.memory_space<vmem>>, vector<64x128xf32>
    tpu.vector_store %arg7[%c0_22, %c0_23], %33 {strides = array<i32>} : memref<64x128xf32, #tpu.memory_space<vmem>>, vector<64x128xf32>,
    return
  }
  func.func @transform_0(%arg0: i32) -> (i32, i32) {
    %c0_i32 = arith.constant 0 : i32
    %c0_i32_0 = arith.constant 0 : i32
    return %arg0, %c0_i32 : i32, i32
  }
  func.func @transform_1(%arg0: i32) -> (i32, i32) {
    %c0_i32 = arith.constant 0 : i32
    %c0_i32_0 = arith.constant 0 : i32
    return %arg0, %c0_i32 : i32, i32
  }
  func.func @transform_2(%arg0: i32) -> (i32, i32) {
    %c0_i32 = arith.constant 0 : i32
    %c0_i32_0 = arith.constant 0 : i32
    %c0_i32_1 = arith.constant 0 : i32
    return %c0_i32, %c0_i32_0 : i32, i32
  }
  func.func @transform_3(%arg0: i32) -> (i32, i32) {
    %c0_i32 = arith.constant 0 : i32
    %c0_i32_0 = arith.constant 0 : i32
    %c0_i32_1 = arith.constant 0 : i32
    return %c0_i32, %c0_i32_0 : i32, i32
  }
  func.func @transform_4(%arg0: i32) -> (i32, i32, i32) {
    %c0_i32 = arith.constant 0 : i32
    %c0_i32_0 = arith.constant 0 : i32
    %c0_i32_1 = arith.constant 0 : i32
    %c0_i32_2 = arith.constant 0 : i32
    return %c0_i32, %c0_i32_0, %c0_i32_1 : i32, i32, i32
  }
  func.func @transform_5(%arg0: i32) -> (i32, i32) {
    %c0_i32 = arith.constant 0 : i32
    %c0_i32_0 = arith.constant 0 : i32
    %c0_i32_1 = arith.constant 0 : i32
    return %c0_i32, %c0_i32_0 : i32, i32
  }
  func.func @transform_6(%arg0: i32) -> (i32, i32) {
    %c0_i32 = arith.constant 0 : i32
    %c0_i32_0 = arith.constant 0 : i32
    return %arg0, %c0_i32 : i32, i32
  }
}

</mosaic_0001>

<llo_original>
// kernel: tpu_custom_call.1
$region0: #{tpu_custom_call.1}
  #allocation0 [shape = 'u32[]', space=smem, size = 0x4, offset = 0x4, fixed_abs, tag = 'smem constant byte address 0x4 - core index']
  #allocation1 [shape = 'u32[144,128]{1,0:T(1,128)}', space=vmem, size = 0x12000, scoped, tag = 'internal scratch']
  %s0 = inlined_call_operand.vmem [shape: bf16[64,16], index: 0, kind: input, shape index: {}]
  %s1 = inlined_call_operand.vmem [shape: s32[64,1], index: 1, kind: input, shape index: {}]
  %s2 = inlined_call_operand.vmem [shape: bf16[16,128], index: 2, kind: input, shape index: {}]
  %s3 = inlined_call_operand.vmem [shape: bf16[8,128], index: 3, kind: input, shape index: {}]
  %s4 = inlined_call_operand.hbm [shape: bf16[2,128,128], index: 4, kind: input, shape index: {}]
  %s5 = inlined_call_operand.vmem [shape: f32[8,128], index: 5, kind: input, shape index: {}]
  %s6 = inlined_call_operand.hbm [shape: f32[64,128], index: 6, kind: output, shape index: {}]
  %s7 = sld [smem:[#allocation0]]
  $region38: #{tpu_custom_call.1} parent=0
    _
  %s9 = ssub.s32 1, %s7
  %s10 = scalar_select 0, %s9, %s7
  $region1: #{tpu_custom_call.1} parent=0
    #allocation2 [shape = 'u8[65536]{0}', space=vmem, size = 0x10000, scoped, tag = 'input window, operand 4, single buffered']
    #allocation3 [shape = 's32[1]{0}', space=sflag, size = 0x4, scoped, tag = 'scoped memory for tpu_custom_call.1']
    #allocation4 [shape = 's32[1]{0}', space=sflag, size = 0x4, scoped, tag = 'scoped memory for tpu_custom_call.1']
    #allocation5 [shape = 'u8[32768]{0}', space=vmem, size = 0x8000, scoped, tag = 'output window, operand 0, single buffered']
    %11 = vsyncpa [#allocation3], 0
    %12 = vsyncpa [#allocation4], 0
    // Predicated region
    $region2: #{tpu_custom_call.1} parent=1 // pred_check
      _
    $region3: #{tpu_custom_call.1} parent=1 // pred_check_branch
      %14 = sbr.rel (0) target = $region5
    $region4: #{tpu_custom_call.1} parent=1 // pred_region
      _
    $region5: #{tpu_custom_call.1} parent=1 // pred_fallthru
      _
    // Predicated region
    $region6: #{tpu_custom_call.1} parent=1 // pred_check
      _
    $region7: #{tpu_custom_call.1} parent=1 // pred_check_branch
      %16 = sbr.rel (0) target = $region9
    $region8: #{tpu_custom_call.1} parent=1 // pred_region
      _
    $region9: #{tpu_custom_call.1} parent=1 // pred_fallthru
      _
    // Predicated region
    $region10: #{tpu_custom_call.1} parent=1 // pred_check
      _
    $region11: #{tpu_custom_call.1} parent=1 // pred_check_branch
      %18 = sbr.rel (0) target = $region13
    $region12: #{tpu_custom_call.1} parent=1 // pred_region
      _
    $region13: #{tpu_custom_call.1} parent=1 // pred_fallthru
      _
    // Predicated region
    $region14: #{tpu_custom_call.1} parent=1 // pred_check
      _
    $region15: #{tpu_custom_call.1} parent=1 // pred_check_branch
      %20 = sbr.rel (0) target = $region17
    $region16: #{tpu_custom_call.1} parent=1 // pred_region
      _
    $region17: #{tpu_custom_call.1} parent=1 // pred_fallthru
      _
    // Predicated region
    $region18: #{tpu_custom_call.1} parent=1 // pred_check
      _
    $region19: #{tpu_custom_call.1} parent=1 // pred_check_branch
      %22 = sbr.rel (0) target = $region21
    $region20: #{tpu_custom_call.1} parent=1 // pred_region
      %s24 = ssub.s32 2048, 2048
      %25 = vsyncadd [#allocation3], %s24
      %s26 = sshll.u32 [#allocation2], 4
      %s27 = int_to_ptr.vmem [resolvable:$true] %s26
      %32 = dma.hbm_to_vmem [thread:$0]  %s4, 2048, %s27, [#allocation3], 64, 64, 4
    $region21: #{tpu_custom_call.1} parent=1 // pred_fallthru
      _
    // Predicated region
    $region22: #{tpu_custom_call.1} parent=1 // pred_check
      _
    $region23: #{tpu_custom_call.1} parent=1 // pred_check_branch
      %34 = sbr.rel (0) target = $region25
    $region24: #{tpu_custom_call.1} parent=1 // pred_region
      _
    $region25: #{tpu_custom_call.1} parent=1 // pred_fallthru
      _
    // Predicated region
    $region26: #{tpu_custom_call.1} parent=1 // pred_check
      _
    $region27: #{tpu_custom_call.1} parent=1 // pred_check_branch
      %36 = sbr.rel (0) target = $region29
    $region28: #{tpu_custom_call.1} parent=1 // pred_region
      %37 = dma.done [#allocation3], 2048
    $region29: #{tpu_custom_call.1} parent=1 // pred_fallthru
      _
    %v39 = vlaneseq
    %v40 = vand.u32 %v39, 127
    %v41 = vld [vmem:[%s1] sm:$0xff]
    %v42 = vld [vmem:[%s1 + $0x8] sm:$0xff]
    %v43 = vld [vmem:[%s1 + $0x10] sm:$0xff]
    %v44 = vld [vmem:[%s1 + $0x18] sm:$0xff]
    %v45 = vld [vmem:[%s1 + $0x20] sm:$0xff]
    %v46 = vld [vmem:[%s1 + $0x28] sm:$0xff]
    %v47 = vld [vmem:[%s1 + $0x30] sm:$0xff]
    %v48 = vld [vmem:[%s1 + $0x38] sm:$0xff]
    %49 = vset.pattern.permute.xlu0 0
    %50 = vperm.xlu0 %49, %v41
    %v51 = vpop.permute.xlu0 %50
    %52 = vset.pattern.permute.xlu0 0
    %53 = vperm.xlu0 %52, %v42
    %v54 = vpop.permute.xlu0 %53
    %55 = vset.pattern.permute.xlu0 0
    %56 = vperm.xlu0 %55, %v43
    %v57 = vpop.permute.xlu0 %56
    %58 = vset.pattern.permute.xlu0 0
    %59 = vperm.xlu0 %58, %v44
    %v60 = vpop.permute.xlu0 %59
    %61 = vset.pattern.permute.xlu0 0
    %62 = vperm.xlu0 %61, %v45
    %v63 = vpop.permute.xlu0 %62
    %64 = vset.pattern.permute.xlu0 0
    %65 = vperm.xlu0 %64, %v46
    %v66 = vpop.permute.xlu0 %65
    %67 = vset.pattern.permute.xlu0 0
    %68 = vperm.xlu0 %67, %v47
    %v69 = vpop.permute.xlu0 %68
    %70 = vset.pattern.permute.xlu0 0
    %71 = vperm.xlu0 %70, %v48
    %v72 = vpop.permute.xlu0 %71
    %vm73 = vcmp.eq.s32.totalorder %v40, %v51
    %vm74 = vcmp.eq.s32.totalorder %v40, %v54
    %vm75 = vcmp.eq.s32.totalorder %v40, %v57
    %vm76 = vcmp.eq.s32.totalorder %v40, %v60
    %vm77 = vcmp.eq.s32.totalorder %v40, %v63
    %vm78 = vcmp.eq.s32.totalorder %v40, %v66
    %vm79 = vcmp.eq.s32.totalorder %v40, %v69
    %vm80 = vcmp.eq.s32.totalorder %v40, %v72
    %v81 = vsel %vm73, 1, 0
    %v82 = vsel %vm74, 1, 0
    %v83 = vsel %vm75, 1, 0
    %v84 = vsel %vm76, 1, 0
    %v85 = vsel %vm77, 1, 0
    %v86 = vsel %vm78, 1, 0
    %v87 = vsel %vm79, 1, 0
    %v88 = vsel %vm80, 1, 0
    %v89 = vcvt.s32.f32 %v81
    %v90 = vcvt.s32.f32 %v82
    %v91 = vcvt.s32.f32 %v83
    %v92 = vcvt.s32.f32 %v84
    %v93 = vcvt.s32.f32 %v85
    %v94 = vcvt.s32.f32 %v86
    %v95 = vcvt.s32.f32 %v87
    %v96 = vcvt.s32.f32 %v88
    %v97 = vpack.c.bf16 %v90, %v89
    %v98 = vpack.c.bf16 %v92, %v91
    %v99 = vpack.c.bf16 %v94, %v93
    %v100 = vpack.c.bf16 %v96, %v95
    %v101 = vld [vmem:[%s0] sm:$0xf]
    %v102 = vld [vmem:[%s0 + $0x4] sm:$0xf]
    %v103 = vld [vmem:[%s0 + $0x8] sm:$0xf]
    %v104 = vld [vmem:[%s0 + $0xc] sm:$0xf]
    %v105 = vld [vmem:[%s0 + $0x10] sm:$0xf]
    %v106 = vld [vmem:[%s0 + $0x14] sm:$0xf]
    %v107 = vld [vmem:[%s0 + $0x18] sm:$0xf]
    %v108 = vld [vmem:[%s0 + $0x1c] sm:$0xf]
    %v109 = vld [vmem:[%s2] sm:$0xf]
    %v110 = vld [vmem:[%s2 + $0x4] sm:$0xf]
    %v111 = vld [vmem:[%s3] sm:$0xf]
    %vm112 = vcmask 64512
    %v114 = vsel %vm112, %v97, 0
    %v117 = vsel %vm112, %v98, 0
    %v120 = vsel %vm112, %v99, 0
    %v123 = vsel %vm112, %v100, 0
    %vm125 = vcmask 1043456
    %v127 = vsel %vm125, %v111, 0
    %129 = vmatprep.subr.bf16.mxu0 0
    %130 = vmatpush1.bf16.msra.mxu0 %v127
    %131 = vmatprep.subr.bf16.mxu0 0
    %132 = vmatpush1.bf16.msra.mxu0 0
    %133 = vmatprep.subr.bf16.mxu0 0
    %134 = vmatpush1.bf16.msra.mxu0 0
    %135 = vmatprep.subr.bf16.mxu0 0
    %136 = vmatpush1.bf16.msra.mxu0 0
    %137 = vmatprep.subr.bf16.mxu0 0
    %138 = vmatpush1.bf16.msra.mxu0 0
    %139 = vmatprep.subr.bf16.mxu0 0
    %140 = vmatpush1.bf16.msra.mxu0 0
    %141 = vmatprep.subr.bf16.mxu0 0
    %142 = vmatpush1.bf16.msra.mxu0 0
    %143 = vmatprep.subr.bf16.mxu0 0
    %144 = vmatpush1.bf16.msra.mxu0 0
    %145 = vmatprep.subr.bf16.mxu0 0
    %146 = vmatpush1.bf16.msra.mxu0 0
    %147 = vmatprep.subr.bf16.mxu0 0
    %148 = vmatpush1.bf16.msra.mxu0 0
    %149 = vmatprep.subr.bf16.mxu0 0
    %150 = vmatpush1.bf16.msra.mxu0 0
    %151 = vmatprep.subr.bf16.mxu0 0
    %152 = vmatpush1.bf16.msra.mxu0 0
    %153 = vmatprep.subr.bf16.mxu0 0
    %154 = vmatpush1.bf16.msra.mxu0 0
    %155 = vmatprep.subr.bf16.mxu0 0
    %156 = vmatpush1.bf16.msra.mxu0 0
    %157 = vmatprep.subr.bf16.mxu0 0
    %158 = vmatpush1.bf16.msra.mxu0 0
    %159 = vmatprep.subr.bf16.mxu0 0
    %160 = vmatpush1.bf16.msra.mxu0 0
    %161 = vmatprep.mubr.bf16.mxu0 0
    %162 = vmatmul.mubr.bf16.gmra.mrb[0].mxu0 %v114
    %v163 = vpop.f32.mrb[0].mxu0
    %v164 = vadd.f32 0.0, %v163
    %v165 = vpop.f32.mrb[0].mxu0
    %v166 = vpop.f32.mrb[0].mxu0
    %v167 = vadd.f32 0.0, %v166
    %v168 = vpop.f32.mrb[0].mxu0
    %169 = vmatprep.mubr.bf16.mxu0 0
    %170 = vmatmul.mubr.bf16.gmra.mrb[0].mxu0 %v117
    %v171 = vpop.f32.mrb[0].mxu0
    %v172 = vadd.f32 0.0, %v171
    %v173 = vpop.f32.mrb[0].mxu0
    %v174 = vpop.f32.mrb[0].mxu0
    %v175 = vadd.f32 0.0, %v174
    %v176 = vpop.f32.mrb[0].mxu0
    %177 = vmatprep.mubr.bf16.mxu0 0
    %178 = vmatmul.mubr.bf16.gmra.mrb[0].mxu0 %v120
    %v179 = vpop.f32.mrb[0].mxu0
    %v180 = vadd.f32 0.0, %v179
    %v181 = vpop.f32.mrb[0].mxu0
    %v182 = vpop.f32.mrb[0].mxu0
    %v183 = vadd.f32 0.0, %v182
    %v184 = vpop.f32.mrb[0].mxu0
    %185 = vmatprep.mubr.bf16.mxu0 0
    %186 = vmatmul.mubr.bf16.gmra.mrb[0].mxu0 %v123
    %v187 = vpop.f32.mrb[0].mxu0
    %v188 = vadd.f32 0.0, %v187
    %v189 = vpop.f32.mrb[0].mxu0
    %v190 = vpop.f32.mrb[0].mxu0
    %v191 = vadd.f32 0.0, %v190
    %v192 = vpop.f32.mrb[0].mxu0
    %193 = vdwg.mxu0
    %v202 = vunpack.c.l.b16 %v101
    %v203 = vunpack.c.l.b16 %v102
    %v204 = vunpack.c.l.b16 %v103
    %v205 = vunpack.c.l.b16 %v104
    %v206 = vunpack.c.l.b16 %v105
    %v207 = vunpack.c.l.b16 %v106
    %v208 = vunpack.c.l.b16 %v107
    %v209 = vunpack.c.l.b16 %v108
    %v210 = vpack.c.b16 %v203, %v202
    %v211 = vpack.c.b16 %v205, %v204
    %v212 = vpack.c.b16 %v207, %v206
    %v213 = vpack.c.b16 %v209, %v208
    %v216 = vunpack.c.l.b16 %v109
    %v217 = vunpack.c.l.b16 %v110
    %v218 = vpack.c.b16 %v217, %v216
    %vm220 = vcmask 130048
    %v222 = vsel %vm220, %v210, 0
    %v225 = vsel %vm220, %v211, 0
    %v228 = vsel %vm220, %v212, 0
    %v231 = vsel %vm220, %v213, 0
    %233 = vmatprep.subr.bf16.mxu0 0
    %234 = vmatpush1.bf16.msra.mxu0 %v218
    %235 = vmatprep.subr.bf16.mxu0 0
    %236 = vmatpush1.bf16.msra.mxu0 0
    %237 = vmatprep.subr.bf16.mxu0 0
    %238 = vmatpush1.bf16.msra.mxu0 0
    %239 = vmatprep.subr.bf16.mxu0 0
    %240 = vmatpush1.bf16.msra.mxu0 0
    %241 = vmatprep.subr.bf16.mxu0 0
    %242 = vmatpush1.bf16.msra.mxu0 0
    %243 = vmatprep.subr.bf16.mxu0 0
    %244 = vmatpush1.bf16.msra.mxu0 0
    %245 = vmatprep.subr.bf16.mxu0 0
    %246 = vmatpush1.bf16.msra.mxu0 0
    %247 = vmatprep.subr.bf16.mxu0 0
    %248 = vmatpush1.bf16.msra.mxu0 0
    %249 = vmatprep.subr.bf16.mxu0 0
    %250 = vmatpush1.bf16.msra.mxu0 0
    %251 = vmatprep.subr.bf16.mxu0 0
    %252 = vmatpush1.bf16.msra.mxu0 0
    %253 = vmatprep.subr.bf16.mxu0 0
    %254 = vmatpush1.bf16.msra.mxu0 0
    %255 = vmatprep.subr.bf16.mxu0 0
    %256 = vmatpush1.bf16.msra.mxu0 0
    %257 = vmatprep.subr.bf16.mxu0 0
    %258 = vmatpush1.bf16.msra.mxu0 0
    %259 = vmatprep.subr.bf16.mxu0 0
    %260 = vmatpush1.bf16.msra.mxu0 0
    %261 = vmatprep.subr.bf16.mxu0 0
    %262 = vmatpush1.bf16.msra.mxu0 0
    %263 = vmatprep.subr.bf16.mxu0 0
    %264 = vmatpush1.bf16.msra.mxu0 0
    %265 = vmatprep.mubr.bf16.mxu0 0
    %266 = vmatmul.mubr.bf16.gmra.mrb[0].mxu0 %v222
    %v267 = vpop.f32.mrb[0].mxu0
    %v268 = vadd.f32 %v164, %v267
    %v269 = vpop.f32.mrb[0].mxu0
    %v270 = vpop.f32.mrb[0].mxu0
    %v271 = vadd.f32 %v167, %v270
    %v272 = vpop.f32.mrb[0].mxu0
    %273 = vmatprep.mubr.bf16.mxu0 0
    %274 = vmatmul.mubr.bf16.gmra.mrb[0].mxu0 %v225
    %v275 = vpop.f32.mrb[0].mxu0
    %v276 = vadd.f32 %v172, %v275
    %v277 = vpop.f32.mrb[0].mxu0
    %v278 = vpop.f32.mrb[0].mxu0
    %v279 = vadd.f32 %v175, %v278
    %v280 = vpop.f32.mrb[0].mxu0
    %281 = vmatprep.mubr.bf16.mxu0 0
    %282 = vmatmul.mubr.bf16.gmra.mrb[0].mxu0 %v228
    %v283 = vpop.f32.mrb[0].mxu0
    %v284 = vadd.f32 %v180, %v283
    %v285 = vpop.f32.mrb[0].mxu0
    %v286 = vpop.f32.mrb[0].mxu0
    %v287 = vadd.f32 %v183, %v286
    %v288 = vpop.f32.mrb[0].mxu0
    %289 = vmatprep.mubr.bf16.mxu0 0
    %290 = vmatmul.mubr.bf16.gmra.mrb[0].mxu0 %v231
    %v291 = vpop.f32.mrb[0].mxu0
    %v292 = vadd.f32 %v188, %v291
    %v293 = vpop.f32.mrb[0].mxu0
    %v294 = vpop.f32.mrb[0].mxu0
    %v295 = vadd.f32 %v191, %v294
    %v296 = vpop.f32.mrb[0].mxu0
    %297 = vdwg.mxu0
    %v298 = vld [vmem:[%s5] sm:$0x1]
    %v299 = vlaneseq
    %v300 = vshrl.u32 %v299, 7
    %v301 = vsub.s32 0, %v300
    %v302 = vrot.slane %v298, %v301
    %v303 = vadd.f32 %v268, %v302
    %v304 = vadd.f32 %v271, %v302
    %v305 = vadd.f32 %v276, %v302
    %v306 = vadd.f32 %v279, %v302
    %v307 = vadd.f32 %v284, %v302
    %v308 = vadd.f32 %v287, %v302
    %v309 = vadd.f32 %v292, %v302
    %v310 = vadd.f32 %v295, %v302
    %v311 = vmax.f32 %v303, 0.0
    %v312 = vmax.f32 %v304, 0.0
    %v313 = vmax.f32 %v305, 0.0
    %v314 = vmax.f32 %v306, 0.0
    %v315 = vmax.f32 %v307, 0.0
    %v316 = vmax.f32 %v308, 0.0
    %v317 = vmax.f32 %v309, 0.0
    %v318 = vmax.f32 %v310, 0.0
    %v319 = vpack.c.bf16 %v312, %v311
    %v320 = vpack.c.bf16 %v314, %v313
    %v321 = vpack.c.bf16 %v316, %v315
    %v322 = vpack.c.bf16 %v318, %v317
    %v323 = vld [vmem:[#allocation2] sm:$0xf]
    %v324 = vld [vmem:[#allocation2 + $0x4] sm:$0xf]
    %v325 = vld [vmem:[#allocation2 + $0x8] sm:$0xf]
    %v326 = vld [vmem:[#allocation2 + $0xc] sm:$0xf]
    %v327 = vld [vmem:[#allocation2 + $0x10] sm:$0xf]
    %v328 = vld [vmem:[#allocation2 + $0x14] sm:$0xf]
    %v329 = vld [vmem:[#allocation2 + $0x18] sm:$0xf]
    %v330 = vld [vmem:[#allocation2 + $0x1c] sm:$0xf]
    %v331 = vld [vmem:[#allocation2 + $0x20] sm:$0xf]
    %v332 = vld [vmem:[#allocation2 + $0x24] sm:$0xf]
    %v333 = vld [vmem:[#allocation2 + $0x28] sm:$0xf]
    %v334 = vld [vmem:[#allocation2 + $0x2c] sm:$0xf]
    %v335 = vld [vmem:[#allocation2 + $0x30] sm:$0xf]
    %v336 = vld [vmem:[#allocation2 + $0x34] sm:$0xf]
    %v337 = vld [vmem:[#allocation2 + $0x38] sm:$0xf]
    %v338 = vld [vmem:[#allocation2 + $0x3c] sm:$0xf]
    %v339 = vld [vmem:[%s5 + $0x1] sm:$0x1]
    %v340 = vlaneseq
    %v341 = vshrl.u32 %v340, 7
    %v342 = vsub.s32 0, %v341
    %v343 = vrot.slane %v339, %v342
    %v360 = vunpack.c.l.b16 %v323
    %v361 = vunpack.c.l.b16 %v324
    %v362 = vunpack.c.l.b16 %v325
    %v363 = vunpack.c.l.b16 %v326
    %v364 = vunpack.c.l.b16 %v327
    %v365 = vunpack.c.l.b16 %v328
    %v366 = vunpack.c.l.b16 %v329
    %v367 = vunpack.c.l.b16 %v330
    %v368 = vunpack.c.l.b16 %v331
    %v369 = vunpack.c.l.b16 %v332
    %v370 = vunpack.c.l.b16 %v333
    %v371 = vunpack.c.l.b16 %v334
    %v372 = vunpack.c.l.b16 %v335
    %v373 = vunpack.c.l.b16 %v336
    %v374 = vunpack.c.l.b16 %v337
    %v375 = vunpack.c.l.b16 %v338
    %v376 = vpack.c.b16 %v361, %v360
    %v377 = vpack.c.b16 %v363, %v362
    %v378 = vpack.c.b16 %v365, %v364
    %v379 = vpack.c.b16 %v367, %v366
    %v380 = vpack.c.b16 %v369, %v368
    %v381 = vpack.c.b16 %v371, %v370
    %v382 = vpack.c.b16 %v373, %v372
    %v383 = vpack.c.b16 %v375, %v374
    %392 = vmatprep.subr.bf16.mxu0 0
    %393 = vmatpush1.bf16.msra.mxu0 %v376
    %394 = vmatprep.subr.bf16.mxu0 0
    %395 = vmatpush1.bf16.msra.mxu0 %v377
    %396 = vmatprep.subr.bf16.mxu0 0
    %397 = vmatpush1.bf16.msra.mxu0 %v378
    %398 = vmatprep.subr.bf16.mxu0 0
    %399 = vmatpush1.bf16.msra.mxu0 %v379
    %400 = vmatprep.subr.bf16.mxu0 0
    %401 = vmatpush1.bf16.msra.mxu0 %v380
    %402 = vmatprep.subr.bf16.mxu0 0
    %403 = vmatpush1.bf16.msra.mxu0 %v381
    %404 = vmatprep.subr.bf16.mxu0 0
    %405 = vmatpush1.bf16.msra.mxu0 %v382
    %406 = vmatprep.subr.bf16.mxu0 0
    %407 = vmatpush1.bf16.msra.mxu0 %v383
    %408 = vmatprep.subr.bf16.mxu0 0
    %409 = vmatpush1.bf16.msra.mxu0 0
    %410 = vmatprep.subr.bf16.mxu0 0
    %411 = vmatpush1.bf16.msra.mxu0 0
    %412 = vmatprep.subr.bf16.mxu0 0
    %413 = vmatpush1.bf16.msra.mxu0 0
    %414 = vmatprep.subr.bf16.mxu0 0
    %415 = vmatpush1.bf16.msra.mxu0 0
    %416 = vmatprep.subr.bf16.mxu0 0
    %417 = vmatpush1.bf16.msra.mxu0 0
    %418 = vmatprep.subr.bf16.mxu0 0
    %419 = vmatpush1.bf16.msra.mxu0 0
    %420 = vmatprep.subr.bf16.mxu0 0
    %421 = vmatpush1.bf16.msra.mxu0 0
    %422 = vmatprep.subr.bf16.mxu0 0
    %423 = vmatpush1.bf16.msra.mxu0 0
    %424 = vmatprep.mubr.bf16.mxu0 0
    %425 = vmatmul.mubr.bf16.gmra.mrb[0].mxu0 %v319
    %v426 = vpop.f32.mrb[0].mxu0
    %v427 = vadd.f32 %v343, %v426
    %v428 = vpop.f32.mrb[0].mxu0
    %v429 = vpop.f32.mrb[0].mxu0
    %v430 = vadd.f32 %v343, %v429
    %v431 = vpop.f32.mrb[0].mxu0
    %432 = vmatprep.mubr.bf16.mxu0 0
    %433 = vmatmul.mubr.bf16.gmra.mrb[0].mxu0 %v320
    %v434 = vpop.f32.mrb[0].mxu0
    %v435 = vadd.f32 %v343, %v434
    %v436 = vpop.f32.mrb[0].mxu0
    %v437 = vpop.f32.mrb[0].mxu0
    %v438 = vadd.f32 %v343, %v437
    %v439 = vpop.f32.mrb[0].mxu0
    %440 = vmatprep.mubr.bf16.mxu0 0
    %441 = vmatmul.mubr.bf16.gmra.mrb[0].mxu0 %v321
    %v442 = vpop.f32.mrb[0].mxu0
    %v443 = vadd.f32 %v343, %v442
    %v444 = vpop.f32.mrb[0].mxu0
    %v445 = vpop.f32.mrb[0].mxu0
    %v446 = vadd.f32 %v343, %v445
    %v447 = vpop.f32.mrb[0].mxu0
    %448 = vmatprep.mubr.bf16.mxu0 0
    %449 = vmatmul.mubr.bf16.gmra.mrb[0].mxu0 %v322
    %v450 = vpop.f32.mrb[0].mxu0
    %v451 = vadd.f32 %v343, %v450
    %v452 = vpop.f32.mrb[0].mxu0
    %v453 = vpop.f32.mrb[0].mxu0
    %v454 = vadd.f32 %v343, %v453
    %v455 = vpop.f32.mrb[0].mxu0
    %456 = vdwg.mxu0
    %v457 = vmax.f32 %v427, 0.0
    %v458 = vmax.f32 %v430, 0.0
    %v459 = vmax.f32 %v435, 0.0
    %v460 = vmax.f32 %v438, 0.0
    %v461 = vmax.f32 %v443, 0.0
    %v462 = vmax.f32 %v446, 0.0
    %v463 = vmax.f32 %v451, 0.0
    %v464 = vmax.f32 %v454, 0.0
    %v465 = vpack.c.bf16 %v458, %v457
    %v466 = vpack.c.bf16 %v460, %v459
    %v467 = vpack.c.bf16 %v462, %v461
    %v468 = vpack.c.bf16 %v464, %v463
    %s469 = scalar_lea.vmem [#allocation2], 64
    %v470 = vld [vmem:[%s469] sm:$0xf]
    %v471 = vld [vmem:[%s469 + $0x4] sm:$0xf]
    %v472 = vld [vmem:[%s469 + $0x8] sm:$0xf]
    %v473 = vld [vmem:[%s469 + $0xc] sm:$0xf]
    %v474 = vld [vmem:[%s469 + $0x10] sm:$0xf]
    %v475 = vld [vmem:[%s469 + $0x14] sm:$0xf]
    %v476 = vld [vmem:[%s469 + $0x18] sm:$0xf]
    %v477 = vld [vmem:[%s469 + $0x1c] sm:$0xf]
    %v478 = vld [vmem:[%s469 + $0x20] sm:$0xf]
    %v479 = vld [vmem:[%s469 + $0x24] sm:$0xf]
    %v480 = vld [vmem:[%s469 + $0x28] sm:$0xf]
    %v481 = vld [vmem:[%s469 + $0x2c] sm:$0xf]
    %v482 = vld [vmem:[%s469 + $0x30] sm:$0xf]
    %v483 = vld [vmem:[%s469 + $0x34] sm:$0xf]
    %v484 = vld [vmem:[%s469 + $0x38] sm:$0xf]
    %v485 = vld [vmem:[%s469 + $0x3c] sm:$0xf]
    %v486 = vld [vmem:[%s5 + $0x2] sm:$0x1]
    %v487 = vlaneseq
    %v488 = vshrl.u32 %v487, 7
    %v489 = vsub.s32 0, %v488
    %v490 = vrot.slane %v486, %v489
    %v507 = vunpack.c.l.b16 %v470
    %v508 = vunpack.c.l.b16 %v471
    %v509 = vunpack.c.l.b16 %v472
    %v510 = vunpack.c.l.b16 %v473
    %v511 = vunpack.c.l.b16 %v474
    %v512 = vunpack.c.l.b16 %v475
    %v513 = vunpack.c.l.b16 %v476
    %v514 = vunpack.c.l.b16 %v477
    %v515 = vunpack.c.l.b16 %v478
    %v516 = vunpack.c.l.b16 %v479
    %v517 = vunpack.c.l.b16 %v480
    %v518 = vunpack.c.l.b16 %v481
    %v519 = vunpack.c.l.b16 %v482
    %v520 = vunpack.c.l.b16 %v483
    %v521 = vunpack.c.l.b16 %v484
    %v522 = vunpack.c.l.b16 %v485
    %v523 = vpack.c.b16 %v508, %v507
    %v524 = vpack.c.b16 %v510, %v509
    %v525 = vpack.c.b16 %v512, %v511
    %v526 = vpack.c.b16 %v514, %v513
    %v527 = vpack.c.b16 %v516, %v515
    %v528 = vpack.c.b16 %v518, %v517
    %v529 = vpack.c.b16 %v520, %v519
    %v530 = vpack.c.b16 %v522, %v521
    %539 = vmatprep.subr.bf16.mxu0 0
    %540 = vmatpush1.bf16.msra.mxu0 %v523
    %541 = vmatprep.subr.bf16.mxu0 0
    %542 = vmatpush1.bf16.msra.mxu0 %v524
    %543 = vmatprep.subr.bf16.mxu0 0
    %544 = vmatpush1.bf16.msra.mxu0 %v525
    %545 = vmatprep.subr.bf16.mxu0 0
    %546 = vmatpush1.bf16.msra.mxu0 %v526
    %547 = vmatprep.subr.bf16.mxu0 0
    %548 = vmatpush1.bf16.msra.mxu0 %v527
    %549 = vmatprep.subr.bf16.mxu0 0
    %550 = vmatpush1.bf16.msra.mxu0 %v528
    %551 = vmatprep.subr.bf16.mxu0 0
    %552 = vmatpush1.bf16.msra.mxu0 %v529
    %553 = vmatprep.subr.bf16.mxu0 0
    %554 = vmatpush1.bf16.msra.mxu0 %v530
    %555 = vmatprep.subr.bf16.mxu0 0
    %556 = vmatpush1.bf16.msra.mxu0 0
    %557 = vmatprep.subr.bf16.mxu0 0
    %558 = vmatpush1.bf16.msra.mxu0 0
    %559 = vmatprep.subr.bf16.mxu0 0
    %560 = vmatpush1.bf16.msra.mxu0 0
    %561 = vmatprep.subr.bf16.mxu0 0
    %562 = vmatpush1.bf16.msra.mxu0 0
    %563 = vmatprep.subr.bf16.mxu0 0
    %564 = vmatpush1.bf16.msra.mxu0 0
    %565 = vmatprep.subr.bf16.mxu0 0
    %566 = vmatpush1.bf16.msra.mxu0 0
    %567 = vmatprep.subr.bf16.mxu0 0
    %568 = vmatpush1.bf16.msra.mxu0 0
    %569 = vmatprep.subr.bf16.mxu0 0
    %570 = vmatpush1.bf16.msra.mxu0 0
    %571 = vmatprep.mubr.bf16.mxu0 0
    %572 = vmatmul.mubr.bf16.gmra.mrb[0].mxu0 %v465
    %v573 = vpop.f32.mrb[0].mxu0
    %v574 = vadd.f32 %v490, %v573
    %v575 = vpop.f32.mrb[0].mxu0
    %v576 = vpop.f32.mrb[0].mxu0
    %v577 = vadd.f32 %v490, %v576
    %v578 = vpop.f32.mrb[0].mxu0
    %579 = vmatprep.mubr.bf16.mxu0 0
    %580 = vmatmul.mubr.bf16.gmra.mrb[0].mxu0 %v466
    %v581 = vpop.f32.mrb[0].mxu0
    %v582 = vadd.f32 %v490, %v581
    %v583 = vpop.f32.mrb[0].mxu0
    %v584 = vpop.f32.mrb[0].mxu0
    %v585 = vadd.f32 %v490, %v584
    %v586 = vpop.f32.mrb[0].mxu0
    %587 = vmatprep.mubr.bf16.mxu0 0
    %588 = vmatmul.mubr.bf16.gmra.mrb[0].mxu0 %v467
    %v589 = vpop.f32.mrb[0].mxu0
    %v590 = vadd.f32 %v490, %v589
    %v591 = vpop.f32.mrb[0].mxu0
    %v592 = vpop.f32.mrb[0].mxu0
    %v593 = vadd.f32 %v490, %v592
    %v594 = vpop.f32.mrb[0].mxu0
    %595 = vmatprep.mubr.bf16.mxu0 0
    %596 = vmatmul.mubr.bf16.gmra.mrb[0].mxu0 %v468
    %v597 = vpop.f32.mrb[0].mxu0
    %v598 = vadd.f32 %v490, %v597
    %v599 = vpop.f32.mrb[0].mxu0
    %v600 = vpop.f32.mrb[0].mxu0
    %v601 = vadd.f32 %v490, %v600
    %v602 = vpop.f32.mrb[0].mxu0
    %603 = vdwg.mxu0
    %604 = vst [vmem:[#allocation5] sm:$0xff] %v574
    %605 = vst [vmem:[#allocation5 + $0x8] sm:$0xff] %v577
    %606 = vst [vmem:[#allocation5 + $0x10] sm:$0xff] %v582
    %607 = vst [vmem:[#allocation5 + $0x18] sm:$0xff] %v585
    %608 = vst [vmem:[#allocation5 + $0x20] sm:$0xff] %v590
    %609 = vst [vmem:[#allocation5 + $0x28] sm:$0xff] %v593
    %610 = vst [vmem:[#allocation5 + $0x30] sm:$0xff] %v598
    %611 = vst [vmem:[#allocation5 + $0x38] sm:$0xff] %v601
    // Predicated region
    $region30: #{tpu_custom_call.1} parent=1 // pred_check
      _
    $region31: #{tpu_custom_call.1} parent=1 // pred_check_branch
      %613 = sbr.rel (0) target = $region33
    $region32: #{tpu_custom_call.1} parent=1 // pred_region
      %s615 = ssub.s32 1024, 1024
      %616 = vsyncadd [#allocation4], %s615
      %s617 = sshll.u32 [#allocation5], 4
      %s618 = int_to_ptr.vmem [resolvable:$true] %s617
      %623 = dma.vmem_to_hbm [thread:$0]  %s618, 1024, %s6, [#allocation4], 128, 128, 8
    $region33: #{tpu_custom_call.1} parent=1 // pred_fallthru
      _
    // Predicated region
    $region34: #{tpu_custom_call.1} parent=1 // pred_check
      _
    $region35: #{tpu_custom_call.1} parent=1 // pred_check_branch
      %625 = sbr.rel (0) target = $region37
    $region36: #{tpu_custom_call.1} parent=1 // pred_region
      %626 = dma.done [#allocation4], 1024
    $region37: #{tpu_custom_call.1} parent=1 // pred_fallthru
      _
    %627 = vsyncpa [#allocation3], 1
    %628 = vsyncpa [#allocation4], 1

</llo_original>
